<compile_context>
chip_gen: v7x
topology: tpu7x:2x2x1
jax: 0.10.0
libtpu: 0.0.40
codegen_flags: <defaults>
</compile_context>

<pallas_src>
import numpy as np
import jax
import jax.numpy as jnp
from jax.experimental import pallas as pl
from jax.experimental.pallas import tpu as pltpu


_BLOCK_TARGET_BYTES = 3 * 1024 * 1024    # ~2-4 MiB blocks hit ~85%+ of HBM roofline
_VMEM_HEADROOM_BYTES = 2 * 1024 * 1024
_MIN_VMEM_LIMIT_BYTES = 16 * 1024 * 1024
_FALLBACK_VMEM_CAP_BYTES = 48 * 1024 * 1024   # safe on v7x (64 MiB/TC physical)


def _adaptive_pool_matrix(in_size: int, out_size: int) -> np.ndarray:
    """P (out_size, in_size) s.t. P @ x averages adaptive bins (PyTorch semantics)."""
    P = np.zeros((out_size, in_size), dtype=np.float32)
    for i in range(out_size):
        start = (i * in_size) // out_size
        end = -((-(i + 1) * in_size) // out_size)  # ceil((i+1)*in/out)
        P[i, start:end] = 1.0 / (end - start)
    return P


def _downpool_kernel(x_ref, p_ref, o_ref):
    # x_ref: (TB, H*W)   block of flattened (n, c) slabs
    # p_ref: (H*W, OP)   kron(Ph, Pw)^T pooling matrix (resident, never re-fetched)
    # o_ref: (TB, OP)
    o_ref[...] = jnp.dot(
        x_ref[...], p_ref[...], preferred_element_type=jnp.float32
    ).astype(o_ref.dtype)


def _vmem_cap_bytes() -> int:
    """Per-generation scoped-VMEM cap (leave 25% slack under physical VMEM)."""
    try:
        cap = int(pltpu.get_tpu_info().vmem_capacity_bytes)
        return max(_MIN_VMEM_LIMIT_BYTES, (3 * cap) // 4)
    except Exception:
        return _FALLBACK_VMEM_CAP_BYTES


def _choose_tb(B: int, row_bytes: int, sublane: int, vmem_rows_cap: int) -> int:
    """Rows per grid step: ~3 MiB blocks, >=8 (even) steps when possible, sublane-aligned."""
    tb = min(max(1, _BLOCK_TARGET_BYTES // max(1, row_bytes)), max(1, vmem_rows_cap))
    if B // 8 >= sublane:
        tb = min(tb, B // 8)          # >= 8 steps total (>= 4 per v7x TensorCore)
    if tb >= B:
        return B
    tb = max(sublane, (tb // sublane) * sublane)
    if tb >= B:
        return B
    steps = pl.cdiv(B, tb)
    if steps > 1 and steps % 2 == 1:  # prefer an even step count (2-TC balance on v7x)
        alt = pl.cdiv(pl.cdiv(B, steps + 1), sublane) * sublane
        if sublane <= alt < tb and pl.cdiv(B, alt) % 2 == 0:
            tb = alt
    return tb


def down_pool(x: jax.Array, output_size: int) -> jax.Array:
    """AdaptiveAvgPool2d((output_size, output_size)) on NCHW input."""
    N, C, H, W = x.shape
    OH = OW = int(output_size)
    HW, OHOW = H * W, OH * OW
    B = N * C

    in_itemsize = int(x.dtype.itemsize)
    out_itemsize = in_itemsize
    sublane = {4: 8, 2: 16, 1: 32}.get(in_itemsize, 8)

    # Match P's dtype to x for the native MXU path (accumulation stays f32).
    _narrow_ok = (np.dtype(jnp.bfloat16), np.dtype(jnp.float16), np.dtype(np.float32))
    p_dtype = x.dtype if np.dtype(x.dtype) in _narrow_ok else jnp.float32
    p_itemsize = int(np.dtype(p_dtype).itemsize)

    # Pad the output lane dim to a multiple of 128 only when the extra HBM
    # writes are cheap (<= 1/8 of the input row bytes): lane-dense stores.
    OP = OHOW
    padded = -(-OHOW // 128) * 128
    if padded != OHOW and (padded - OHOW) * out_itemsize * 8 <= HW * in_itemsize:
        OP = padded

    # Pooling matrix: kron(Ph, Pw)^T, shape (H*W, OP). Static, built on host.
    ph = _adaptive_pool_matrix(H, OH)
    pw = _adaptive_pool_matrix(W, OW)
    p_np = np.kron(ph, pw).T                       # (HW, OHOW), float32
    if OP != OHOW:
        p_np = np.pad(p_np, ((0, 0), (0, OP - OHOW)))
    p = jnp.asarray(p_np, dtype=p_dtype)

    # Free row-major reshape: (N, C, H, W) -> (N*C, H*W). Lane dim = H*W.
    x2 = x.reshape(B, HW)

    # VMEM accounting: double-buffered (in + out) blocks + P (counted as
    # double-buffered, conservative even if Buffered(1) is honored) + headroom.
    row_bytes = HW * in_itemsize + OP * out_itemsize
    p_bytes = 2 * HW * OP * p_itemsize
    vmem_cap = _vmem_cap_bytes()
    vmem_rows_cap = max(
        sublane, (vmem_cap - p_bytes - _VMEM_HEADROOM_BYTES) // (2 * row_bytes)
    )
    TB = _choose_tb(B, row_bytes, sublane, vmem_rows_cap)
    grid = (pl.cdiv(B, TB),)

    vmem_need = 2 * TB * row_bytes + p_bytes + _VMEM_HEADROOM_BYTES
    vmem_limit = int(min(vmem_cap, max(vmem_need, _MIN_VMEM_LIMIT_BYTES)))

    cost = pl.CostEstimate(
        flops=2 * B * HW * OP,
        transcendentals=0,
        bytes_accessed=B * row_bytes + HW * OP * p_itemsize,
    )

    def _run(single_buffer_p: bool):
        if single_buffer_p:
            # P's block index never changes: one buffer is enough (saves VMEM).
            p_spec = pl.BlockSpec((HW, OP), lambda i: (0, 0),
                                  pipeline_mode=pl.Buffered(1))
        else:
            p_spec = pl.BlockSpec((HW, OP), lambda i: (0, 0))
        return pl.pallas_call(
            _downpool_kernel,
            out_shape=jax.ShapeDtypeStruct((B, OP), x.dtype),
            grid=grid,
            in_specs=[pl.BlockSpec((TB, HW), lambda i: (i, 0)), p_spec],
            out_specs=pl.BlockSpec((TB, OP), lambda i: (i, 0)),
            compiler_params=pltpu.CompilerParams(
                dimension_semantics=("parallel",),
                vmem_limit_bytes=vmem_limit,
            ),
            cost_estimate=cost,
        )(x2, p)

    try:
        out2 = _run(True)
    except Exception:
        # Fallback for jax versions where Buffered(1) on a resident block is
        # not supported by the grid pipeliner; semantics are identical.
        out2 = _run(False)

    if OP != OHOW:
        out2 = out2[:, :OHOW]
    return out2.reshape(N, C, OH, OW)


def _reference_adaptive_avg_pool(x: np.ndarray, output_size: int) -> np.ndarray:
    """Pure-numpy reference with PyTorch AdaptiveAvgPool2d semantics."""
    N, C, H, W = x.shape
    OH = OW = output_size
    out = np.zeros((N, C, OH, OW), dtype=x.dtype)
    for i in range(OH):
        hs = (i * H) // OH
        he = -((-(i + 1) * H) // OH)
        for j in range(OW):
            ws = (j * W) // OW
            we = -((-(j + 1) * W) // OW)
            out[:, :, i, j] = x[:, :, hs:he, ws:we].mean(axis=(2, 3))
    return out


if __name__ == "__main__":
    key = jax.random.PRNGKey(0)
    N, C, H, W = 2, 4, 16, 16
    output_size = 7  # non-divisible on purpose -> exercises adaptive bin sizes

    x = jax.random.normal(key, (N, C, H, W), dtype=jnp.float32)

    y = down_pool(x, output_size)
    y = jax.block_until_ready(y)

    y_ref = _reference_adaptive_avg_pool(np.asarray(x), output_size)
    np.testing.assert_allclose(np.asarray(y), y_ref, rtol=1e-5, atol=1e-5)

    print("KERNEL_OK")
</pallas_src>

<mosaic_0001>
module attributes {stable_mosaic.version = 11 : i64} {
  func.func @_downpool_kernel(%arg0: i32, %arg1: memref<8x256xf32, #tpu.memory_space<vmem>>, %arg2: memref<256x49xf32, #tpu.memory_space<vmem>>, %arg3: memref<8x49xf32, #tpu.memory_space<vmem>>) attributes {dimension_semantics = [#tpu.dimension_semantics<parallel>], iteration_bounds = array<i64: 1>, scalar_prefetch = 0 : i64, scratch_operands = 0 : i64, tpu.core_type = #tpu.core_type<tc>, window_params = [{transform_indices = @transform_0, window_bounds = array<i64: 8, 256>}, {pipeline_mode = #tpu.pipeline_mode<synchronous>, transform_indices = @transform_1, window_bounds = array<i64: 256, 49>}, {transform_indices = @transform_2, window_bounds = array<i64: 8, 49>}]} {
    %c0 = arith.constant 0 : index
    %c0_0 = arith.constant 0 : index
    %0 = vector.load %arg1[%c0, %c0_0] : memref<8x256xf32, #tpu.memory_space<vmem>>, vector<8x256xf32>
    %c0_1 = arith.constant 0 : index
    %c0_2 = arith.constant 0 : index
    %1 = vector.load %arg2[%c0_1, %c0_2] : memref<256x49xf32, #tpu.memory_space<vmem>>, vector<256x49xf32>
    %cst = arith.constant dense<0.000000e+00> : vector<8x49xf32>
    %2 = tpu.matmul %0, %1, %cst {dimension_numbers = #tpu.dot_dimension_numbers<[1], [0], [0], [1], [0, 0, 1, 1], [], []>} : vector<8x256xf32>, vector<256x49xf32>, vector<8x49xf32> -> vector<8x49xf32>
    %c0_3 = arith.constant 0 : index
    %c0_4 = arith.constant 0 : index
    %3 = vector.load %arg3[%c0_3, %c0_4] : memref<8x49xf32, #tpu.memory_space<vmem>>, vector<8x49xf32>
    tpu.vector_store %arg3[%c0_3, %c0_4], %2 {strides = array<i32>} : memref<8x49xf32, #tpu.memory_space<vmem>>, vector<8x49xf32>,
    return
  }
  func.func @transform_0(%arg0: i32) -> (i32, i32) {
    %c0_i32 = arith.constant 0 : i32
    %c0_i32_0 = arith.constant 0 : i32
    return %arg0, %c0_i32 : i32, i32
  }
  func.func @transform_1(%arg0: i32) -> (i32, i32) {
    %c0_i32 = arith.constant 0 : i32
    %c0_i32_0 = arith.constant 0 : i32
    %c0_i32_1 = arith.constant 0 : i32
    return %c0_i32, %c0_i32_0 : i32, i32
  }
  func.func @transform_2(%arg0: i32) -> (i32, i32) {
    %c0_i32 = arith.constant 0 : i32
    %c0_i32_0 = arith.constant 0 : i32
    return %arg0, %c0_i32 : i32, i32
  }
}

module attributes {stable_mosaic.version = 11 : i64} {
  func.func @_downpool_kernel(%arg0: i32, %arg1: memref<8x256xf32, #tpu.memory_space<vmem>>, %arg2: memref<256x49xf32, #tpu.memory_space<vmem>>, %arg3: memref<8x49xf32, #tpu.memory_space<vmem>>) attributes {dimension_semantics = [#tpu.dimension_semantics<parallel>], iteration_bounds = array<i64: 1>, scalar_prefetch = 0 : i64, scratch_operands = 0 : i64, tpu.core_type = #tpu.core_type<tc>, window_params = [{transform_indices = @transform_0, window_bounds = array<i64: 8, 256>}, {pipeline_mode = #tpu.pipeline_mode<synchronous>, transform_indices = @transform_1, window_bounds = array<i64: 256, 49>}, {transform_indices = @transform_2, window_bounds = array<i64: 8, 49>}]} {
    %c0 = arith.constant 0 : index
    %c0_0 = arith.constant 0 : index
    %0 = vector.load %arg1[%c0, %c0_0] : memref<8x256xf32, #tpu.memory_space<vmem>>, vector<8x256xf32>
    %c0_1 = arith.constant 0 : index
    %c0_2 = arith.constant 0 : index
    %1 = vector.load %arg2[%c0_1, %c0_2] : memref<256x49xf32, #tpu.memory_space<vmem>>, vector<256x49xf32>
    %cst = arith.constant dense<0.000000e+00> : vector<8x49xf32>
    %2 = tpu.matmul %0, %1, %cst {dimension_numbers = #tpu.dot_dimension_numbers<[1], [0], [0], [1], [0, 0, 1, 1], [], []>} : vector<8x256xf32>, vector<256x49xf32>, vector<8x49xf32> -> vector<8x49xf32>
    %c0_3 = arith.constant 0 : index
    %c0_4 = arith.constant 0 : index
    %3 = vector.load %arg3[%c0_3, %c0_4] : memref<8x49xf32, #tpu.memory_space<vmem>>, vector<8x49xf32>
    tpu.vector_store %arg3[%c0_3, %c0_4], %2 {strides = array<i32>} : memref<8x49xf32, #tpu.memory_space<vmem>>, vector<8x49xf32>,
    return
  }
  func.func @transform_0(%arg0: i32) -> (i32, i32) {
    %c0_i32 = arith.constant 0 : i32
    %c0_i32_0 = arith.constant 0 : i32
    return %arg0, %c0_i32 : i32, i32
  }
  func.func @transform_1(%arg0: i32) -> (i32, i32) {
    %c0_i32 = arith.constant 0 : i32
    %c0_i32_0 = arith.constant 0 : i32
    %c0_i32_1 = arith.constant 0 : i32
    return %c0_i32, %c0_i32_0 : i32, i32
  }
  func.func @transform_2(%arg0: i32) -> (i32, i32) {
    %c0_i32 = arith.constant 0 : i32
    %c0_i32_0 = arith.constant 0 : i32
    return %arg0, %c0_i32 : i32, i32
  }
}

</mosaic_0001>

<llo_original>
// kernel: tpu_custom_call.1
$region0: #{tpu_custom_call.1}
  #allocation0 [shape = 'u32[]', space=smem, size = 0x4, offset = 0x4, fixed_abs, tag = 'smem constant byte address 0x4 - core index']
  #allocation1 [shape = 'u32[144,128]{1,0:T(1,128)}', space=vmem, size = 0x12000, scoped, tag = 'internal scratch']
  %s0 = inlined_call_operand.vmem [shape: f32[8,256], index: 0, kind: input, shape index: {}]
  %s1 = inlined_call_operand.vmem [shape: f32[256,49], index: 1, kind: input, shape index: {}]
  %s2 = inlined_call_operand.hbm [shape: f32[8,49], index: 2, kind: output, shape index: {}]
  %s3 = sld [smem:[#allocation0]]
  $region18: #{tpu_custom_call.1} parent=0
    _
  %s5 = ssub.s32 1, %s3
  %s6 = scalar_select 0, %s5, %s3
  $region1: #{tpu_custom_call.1} parent=0
    #allocation2 [shape = 'u8[4096]{0}', space=vmem, size = 0x1000, scoped, tag = 'output window, operand 0, single buffered']
    #allocation3 [shape = 's32[1]{0}', space=sflag, size = 0x4, scoped, tag = 'scoped memory for tpu_custom_call.1']
    %7 = vsyncpa [#allocation3], 0
    // Predicated region
    $region2: #{tpu_custom_call.1} parent=1 // pred_check
      _
    $region3: #{tpu_custom_call.1} parent=1 // pred_check_branch
      %9 = sbr.rel (0) target = $region5
    $region4: #{tpu_custom_call.1} parent=1 // pred_region
      _
    $region5: #{tpu_custom_call.1} parent=1 // pred_fallthru
      _
    // Predicated region
    $region6: #{tpu_custom_call.1} parent=1 // pred_check
      _
    $region7: #{tpu_custom_call.1} parent=1 // pred_check_branch
      %11 = sbr.rel (0) target = $region9
    $region8: #{tpu_custom_call.1} parent=1 // pred_region
      _
    $region9: #{tpu_custom_call.1} parent=1 // pred_fallthru
      _
    %v12 = vld [vmem:[%s0] sm:$0xff]
    %v13 = vld [vmem:[%s0 + $0x8] sm:$0xff]
    %v14 = vld [vmem:[%s1] sm:$0xff]
    %v15 = vld [vmem:[%s1 + $0x8] sm:$0xff]
    %v16 = vld [vmem:[%s1 + $0x10] sm:$0xff]
    %v17 = vld [vmem:[%s1 + $0x18] sm:$0xff]
    %v18 = vld [vmem:[%s1 + $0x20] sm:$0xff]
    %v19 = vld [vmem:[%s1 + $0x28] sm:$0xff]
    %v20 = vld [vmem:[%s1 + $0x30] sm:$0xff]
    %v21 = vld [vmem:[%s1 + $0x38] sm:$0xff]
    %v22 = vld [vmem:[%s1 + $0x40] sm:$0xff]
    %v23 = vld [vmem:[%s1 + $0x48] sm:$0xff]
    %v24 = vld [vmem:[%s1 + $0x50] sm:$0xff]
    %v25 = vld [vmem:[%s1 + $0x58] sm:$0xff]
    %v26 = vld [vmem:[%s1 + $0x60] sm:$0xff]
    %v27 = vld [vmem:[%s1 + $0x68] sm:$0xff]
    %v28 = vld [vmem:[%s1 + $0x70] sm:$0xff]
    %v29 = vld [vmem:[%s1 + $0x78] sm:$0xff]
    %v30 = vld [vmem:[%s1 + $0x80] sm:$0xff]
    %v31 = vld [vmem:[%s1 + $0x88] sm:$0xff]
    %v32 = vld [vmem:[%s1 + $0x90] sm:$0xff]
    %v33 = vld [vmem:[%s1 + $0x98] sm:$0xff]
    %v34 = vld [vmem:[%s1 + $0xa0] sm:$0xff]
    %v35 = vld [vmem:[%s1 + $0xa8] sm:$0xff]
    %v36 = vld [vmem:[%s1 + $0xb0] sm:$0xff]
    %v37 = vld [vmem:[%s1 + $0xb8] sm:$0xff]
    %v38 = vld [vmem:[%s1 + $0xc0] sm:$0xff]
    %v39 = vld [vmem:[%s1 + $0xc8] sm:$0xff]
    %v40 = vld [vmem:[%s1 + $0xd0] sm:$0xff]
    %v41 = vld [vmem:[%s1 + $0xd8] sm:$0xff]
    %v42 = vld [vmem:[%s1 + $0xe0] sm:$0xff]
    %v43 = vld [vmem:[%s1 + $0xe8] sm:$0xff]
    %v44 = vld [vmem:[%s1 + $0xf0] sm:$0xff]
    %v45 = vld [vmem:[%s1 + $0xf8] sm:$0xff]
    %46 = vmatprep.subr.mxu0 0.0
    %47 = vmatpush1.msra.mxu0 %v14
    %48 = vmatprep.subr.mxu0 0.0
    %49 = vmatpush1.msra.mxu0 %v15
    %50 = vmatprep.subr.mxu0 0.0
    %51 = vmatpush1.msra.mxu0 %v16
    %52 = vmatprep.subr.mxu0 0.0
    %53 = vmatpush1.msra.mxu0 %v17
    %54 = vmatprep.subr.mxu0 0.0
    %55 = vmatpush1.msra.mxu0 %v18
    %56 = vmatprep.subr.mxu0 0.0
    %57 = vmatpush1.msra.mxu0 %v19
    %58 = vmatprep.subr.mxu0 0.0
    %59 = vmatpush1.msra.mxu0 %v20
    %60 = vmatprep.subr.mxu0 0.0
    %61 = vmatpush1.msra.mxu0 %v21
    %62 = vmatprep.subr.mxu0 0.0
    %63 = vmatpush1.msra.mxu0 %v22
    %64 = vmatprep.subr.mxu0 0.0
    %65 = vmatpush1.msra.mxu0 %v23
    %66 = vmatprep.subr.mxu0 0.0
    %67 = vmatpush1.msra.mxu0 %v24
    %68 = vmatprep.subr.mxu0 0.0
    %69 = vmatpush1.msra.mxu0 %v25
    %70 = vmatprep.subr.mxu0 0.0
    %71 = vmatpush1.msra.mxu0 %v26
    %72 = vmatprep.subr.mxu0 0.0
    %73 = vmatpush1.msra.mxu0 %v27
    %74 = vmatprep.subr.mxu0 0.0
    %75 = vmatpush1.msra.mxu0 %v28
    %76 = vmatprep.subr.mxu0 0.0
    %77 = vmatpush1.msra.mxu0 %v29
    %78 = vmatprep.subr.mxu0 0.0
    %79 = vmatpush1.msra.mxu0 %v30
    %80 = vmatprep.subr.mxu0 0.0
    %81 = vmatpush1.msra.mxu0 %v31
    %82 = vmatprep.subr.mxu0 0.0
    %83 = vmatpush1.msra.mxu0 %v32
    %84 = vmatprep.subr.mxu0 0.0
    %85 = vmatpush1.msra.mxu0 %v33
    %86 = vmatprep.subr.mxu0 0.0
    %87 = vmatpush1.msra.mxu0 %v34
    %88 = vmatprep.subr.mxu0 0.0
    %89 = vmatpush1.msra.mxu0 %v35
    %90 = vmatprep.subr.mxu0 0.0
    %91 = vmatpush1.msra.mxu0 %v36
    %92 = vmatprep.subr.mxu0 0.0
    %93 = vmatpush1.msra.mxu0 %v37
    %94 = vmatprep.subr.mxu0 0.0
    %95 = vmatpush1.msra.mxu0 %v38
    %96 = vmatprep.subr.mxu0 0.0
    %97 = vmatpush1.msra.mxu0 %v39
    %98 = vmatprep.subr.mxu0 0.0
    %99 = vmatpush1.msra.mxu0 %v40
    %100 = vmatprep.subr.mxu0 0.0
    %101 = vmatpush1.msra.mxu0 %v41
    %102 = vmatprep.subr.mxu0 0.0
    %103 = vmatpush1.msra.mxu0 %v42
    %104 = vmatprep.subr.mxu0 0.0
    %105 = vmatpush1.msra.mxu0 %v43
    %106 = vmatprep.subr.mxu0 0.0
    %107 = vmatpush1.msra.mxu0 %v44
    %108 = vmatprep.subr.mxu0 0.0
    %109 = vmatpush1.msra.mxu0 %v45
    %110 = vmatprep.mubr.f32.mxu0 %v13
    %111 = vmatmul.mubr.f32.gmra.mrb[0].mxu0 %v12
    %v112 = vpop.f32.mrb[0].mxu0
    %v113 = vadd.f32 0.0, %v112
    %v114 = vpop.f32.mrb[0].mxu0
    %115 = vdwg.mxu0
    %vm116 = vcmask 400384
    %117 = vst.msk [vmem:[#allocation2] sm:$0xff] %vm116, %v113
    // Predicated region
    $region10: #{tpu_custom_call.1} parent=1 // pred_check
      _
    $region11: #{tpu_custom_call.1} parent=1 // pred_check_branch
      %119 = sbr.rel (0) target = $region13
    $region12: #{tpu_custom_call.1} parent=1 // pred_region
      %s121 = ssub.s32 128, 128
      %122 = vsyncadd [#allocation3], %s121
      %s124 = sshll.u32 [#allocation2], 4
      %s125 = int_to_ptr.vmem [resolvable:$true] %s124
      %127 = dma.vmem_to_hbm [thread:$0]  %s125, 128, %s2, [#allocation3]
    $region13: #{tpu_custom_call.1} parent=1 // pred_fallthru
      _
    // Predicated region
    $region14: #{tpu_custom_call.1} parent=1 // pred_check
      _
    $region15: #{tpu_custom_call.1} parent=1 // pred_check_branch
      %129 = sbr.rel (0) target = $region17
    $region16: #{tpu_custom_call.1} parent=1 // pred_region
      %130 = dma.done [#allocation3], 128
    $region17: #{tpu_custom_call.1} parent=1 // pred_fallthru
      _
    %131 = vsyncpa [#allocation3], 1

// kernel: tpu_custom_call.1
$region0: #{tpu_custom_call.1}
  #allocation0 [shape = 'u32[]', space=smem, size = 0x4, offset = 0x4, fixed_abs, tag = 'smem constant byte address 0x4 - core index']
  #allocation1 [shape = 'u32[144,128]{1,0:T(1,128)}', space=vmem, size = 0x12000, scoped, tag = 'internal scratch']
  %s0 = inlined_call_operand.vmem [shape: f32[8,256], index: 0, kind: input, shape index: {}]
  %s1 = inlined_call_operand.vmem [shape: f32[256,49], index: 1, kind: input, shape index: {}]
  %s2 = inlined_call_operand.hbm [shape: f32[8,49], index: 2, kind: output, shape index: {}]
  %s3 = sld [smem:[#allocation0]]
  $region18: #{tpu_custom_call.1} parent=0
    _
  %s5 = ssub.s32 1, %s3
  %s6 = scalar_select 0, %s5, %s3
  $region1: #{tpu_custom_call.1} parent=0
    #allocation2 [shape = 'u8[4096]{0}', space=vmem, size = 0x1000, scoped, tag = 'output window, operand 0, single buffered']
    #allocation3 [shape = 's32[1]{0}', space=sflag, size = 0x4, scoped, tag = 'scoped memory for tpu_custom_call.1']
    %7 = vsyncpa [#allocation3], 0
    // Predicated region
    $region2: #{tpu_custom_call.1} parent=1 // pred_check
      _
    $region3: #{tpu_custom_call.1} parent=1 // pred_check_branch
      %9 = sbr.rel (0) target = $region5
    $region4: #{tpu_custom_call.1} parent=1 // pred_region
      _
    $region5: #{tpu_custom_call.1} parent=1 // pred_fallthru
      _
    // Predicated region
    $region6: #{tpu_custom_call.1} parent=1 // pred_check
      _
    $region7: #{tpu_custom_call.1} parent=1 // pred_check_branch
      %11 = sbr.rel (0) target = $region9
    $region8: #{tpu_custom_call.1} parent=1 // pred_region
      _
    $region9: #{tpu_custom_call.1} parent=1 // pred_fallthru
      _
    %v12 = vld [vmem:[%s0] sm:$0xff]
    %v13 = vld [vmem:[%s0 + $0x8] sm:$0xff]
    %v14 = vld [vmem:[%s1] sm:$0xff]
    %v15 = vld [vmem:[%s1 + $0x8] sm:$0xff]
    %v16 = vld [vmem:[%s1 + $0x10] sm:$0xff]
    %v17 = vld [vmem:[%s1 + $0x18] sm:$0xff]
    %v18 = vld [vmem:[%s1 + $0x20] sm:$0xff]
    %v19 = vld [vmem:[%s1 + $0x28] sm:$0xff]
    %v20 = vld [vmem:[%s1 + $0x30] sm:$0xff]
    %v21 = vld [vmem:[%s1 + $0x38] sm:$0xff]
    %v22 = vld [vmem:[%s1 + $0x40] sm:$0xff]
    %v23 = vld [vmem:[%s1 + $0x48] sm:$0xff]
    %v24 = vld [vmem:[%s1 + $0x50] sm:$0xff]
    %v25 = vld [vmem:[%s1 + $0x58] sm:$0xff]
    %v26 = vld [vmem:[%s1 + $0x60] sm:$0xff]
    %v27 = vld [vmem:[%s1 + $0x68] sm:$0xff]
    %v28 = vld [vmem:[%s1 + $0x70] sm:$0xff]
    %v29 = vld [vmem:[%s1 + $0x78] sm:$0xff]
    %v30 = vld [vmem:[%s1 + $0x80] sm:$0xff]
    %v31 = vld [vmem:[%s1 + $0x88] sm:$0xff]
    %v32 = vld [vmem:[%s1 + $0x90] sm:$0xff]
    %v33 = vld [vmem:[%s1 + $0x98] sm:$0xff]
    %v34 = vld [vmem:[%s1 + $0xa0] sm:$0xff]
    %v35 = vld [vmem:[%s1 + $0xa8] sm:$0xff]
    %v36 = vld [vmem:[%s1 + $0xb0] sm:$0xff]
    %v37 = vld [vmem:[%s1 + $0xb8] sm:$0xff]
    %v38 = vld [vmem:[%s1 + $0xc0] sm:$0xff]
    %v39 = vld [vmem:[%s1 + $0xc8] sm:$0xff]
    %v40 = vld [vmem:[%s1 + $0xd0] sm:$0xff]
    %v41 = vld [vmem:[%s1 + $0xd8] sm:$0xff]
    %v42 = vld [vmem:[%s1 + $0xe0] sm:$0xff]
    %v43 = vld [vmem:[%s1 + $0xe8] sm:$0xff]
    %v44 = vld [vmem:[%s1 + $0xf0] sm:$0xff]
    %v45 = vld [vmem:[%s1 + $0xf8] sm:$0xff]
    %46 = vmatprep.subr.mxu0 0.0
    %47 = vmatpush1.msra.mxu0 %v14
    %48 = vmatprep.subr.mxu0 0.0
    %49 = vmatpush1.msra.mxu0 %v15
    %50 = vmatprep.subr.mxu0 0.0
    %51 = vmatpush1.msra.mxu0 %v16
    %52 = vmatprep.subr.mxu0 0.0
    %53 = vmatpush1.msra.mxu0 %v17
    %54 = vmatprep.subr.mxu0 0.0
    %55 = vmatpush1.msra.mxu0 %v18
    %56 = vmatprep.subr.mxu0 0.0
    %57 = vmatpush1.msra.mxu0 %v19
    %58 = vmatprep.subr.mxu0 0.0
    %59 = vmatpush1.msra.mxu0 %v20
    %60 = vmatprep.subr.mxu0 0.0
    %61 = vmatpush1.msra.mxu0 %v21
    %62 = vmatprep.subr.mxu0 0.0
    %63 = vmatpush1.msra.mxu0 %v22
    %64 = vmatprep.subr.mxu0 0.0
    %65 = vmatpush1.msra.mxu0 %v23
    %66 = vmatprep.subr.mxu0 0.0
    %67 = vmatpush1.msra.mxu0 %v24
    %68 = vmatprep.subr.mxu0 0.0
    %69 = vmatpush1.msra.mxu0 %v25
    %70 = vmatprep.subr.mxu0 0.0
    %71 = vmatpush1.msra.mxu0 %v26
    %72 = vmatprep.subr.mxu0 0.0
    %73 = vmatpush1.msra.mxu0 %v27
    %74 = vmatprep.subr.mxu0 0.0
    %75 = vmatpush1.msra.mxu0 %v28
    %76 = vmatprep.subr.mxu0 0.0
    %77 = vmatpush1.msra.mxu0 %v29
    %78 = vmatprep.subr.mxu0 0.0
    %79 = vmatpush1.msra.mxu0 %v30
    %80 = vmatprep.subr.mxu0 0.0
    %81 = vmatpush1.msra.mxu0 %v31
    %82 = vmatprep.subr.mxu0 0.0
    %83 = vmatpush1.msra.mxu0 %v32
    %84 = vmatprep.subr.mxu0 0.0
    %85 = vmatpush1.msra.mxu0 %v33
    %86 = vmatprep.subr.mxu0 0.0
    %87 = vmatpush1.msra.mxu0 %v34
    %88 = vmatprep.subr.mxu0 0.0
    %89 = vmatpush1.msra.mxu0 %v35
    %90 = vmatprep.subr.mxu0 0.0
    %91 = vmatpush1.msra.mxu0 %v36
    %92 = vmatprep.subr.mxu0 0.0
    %93 = vmatpush1.msra.mxu0 %v37
    %94 = vmatprep.subr.mxu0 0.0
    %95 = vmatpush1.msra.mxu0 %v38
    %96 = vmatprep.subr.mxu0 0.0
    %97 = vmatpush1.msra.mxu0 %v39
    %98 = vmatprep.subr.mxu0 0.0
    %99 = vmatpush1.msra.mxu0 %v40
    %100 = vmatprep.subr.mxu0 0.0
    %101 = vmatpush1.msra.mxu0 %v41
    %102 = vmatprep.subr.mxu0 0.0
    %103 = vmatpush1.msra.mxu0 %v42
    %104 = vmatprep.subr.mxu0 0.0
    %105 = vmatpush1.msra.mxu0 %v43
    %106 = vmatprep.subr.mxu0 0.0
    %107 = vmatpush1.msra.mxu0 %v44
    %108 = vmatprep.subr.mxu0 0.0
    %109 = vmatpush1.msra.mxu0 %v45
    %110 = vmatprep.mubr.f32.mxu0 %v13
    %111 = vmatmul.mubr.f32.gmra.mrb[0].mxu0 %v12
    %v112 = vpop.f32.mrb[0].mxu0
    %v113 = vadd.f32 0.0, %v112
    %v114 = vpop.f32.mrb[0].mxu0
    %115 = vdwg.mxu0
    %vm116 = vcmask 400384
    %117 = vst.msk [vmem:[#allocation2] sm:$0xff] %vm116, %v113
    // Predicated region
    $region10: #{tpu_custom_call.1} parent=1 // pred_check
      _
    $region11: #{tpu_custom_call.1} parent=1 // pred_check_branch
      %119 = sbr.rel (0) target = $region13
    $region12: #{tpu_custom_call.1} parent=1 // pred_region
      %s121 = ssub.s32 128, 128
      %122 = vsyncadd [#allocation3], %s121
      %s124 = sshll.u32 [#allocation2], 4
      %s125 = int_to_ptr.vmem [resolvable:$true] %s124
      %127 = dma.vmem_to_hbm [thread:$0]  %s125, 128, %s2, [#allocation3]
    $region13: #{tpu_custom_call.1} parent=1 // pred_fallthru
      _
    // Predicated region
    $region14: #{tpu_custom_call.1} parent=1 // pred_check
      _
    $region15: #{tpu_custom_call.1} parent=1 // pred_check_branch
      %129 = sbr.rel (0) target = $region17
    $region16: #{tpu_custom_call.1} parent=1 // pred_region
      %130 = dma.done [#allocation3], 128
    $region17: #{tpu_custom_call.1} parent=1 // pred_fallthru
      _
    %131 = vsyncpa [#allocation3], 1

</llo_original>
